<compile_context>
chip_gen: v5e
topology: v5e:2x2
jax: 0.10.0
libtpu: 0.0.40
codegen_flags: <defaults>
</compile_context>

<pallas_src>
import functools

import jax
import jax.numpy as jnp
from jax.experimental import pallas as pl
from jax.experimental.pallas import tpu as pltpu


def _svm_loss_kernel(x_ref, y_ref, partial_ref, *, alpha, n_rows):
    """One batch tile: partial_ref <- sum_i [ max_j(x_ij + a*1[j!=y_i]) - x_{i,y_i} ]."""
    i = pl.program_id(0)
    tn, c = x_ref.shape

    x = x_ref[...].astype(jnp.float32)      # per-tile upcast; HBM traffic stays native dtype
    y = y_ref[...]                          # (TN, 1) int32 label ids

    # Class ids generated in-kernel (== the module's registered `labels` buffer).
    class_idx = jax.lax.broadcasted_iota(jnp.int32, (tn, c), 1)
    is_gt = class_idx == y                  # (TN, C) exact int compare

    # alpha folded into the select: aug = x + (0 on GT lane, alpha elsewhere).
    aug = x + jnp.where(is_gt, 0.0, alpha)
    max_aug = jnp.max(aug, axis=-1, keepdims=True)                        # (TN, 1)
    gt_score = jnp.sum(jnp.where(is_gt, x, 0.0), axis=-1, keepdims=True)  # (TN, 1) = x[i, y_i]
    per_sample = max_aug - gt_score                                       # (TN, 1)

    # Mask rows beyond the true batch size (ragged final tile contributes 0).
    row_idx = i * tn + jax.lax.broadcasted_iota(jnp.int32, (tn, 1), 0)
    tile_sum = jnp.sum(jnp.where(row_idx < n_rows, per_sample, 0.0))

    # Lane-dense (1, 8, 128) output block -> full-width unmasked store.
    partial_ref[...] = jnp.full(partial_ref.shape, tile_sum, dtype=jnp.float32)


def _choose_row_tile(n, c, itemsize):
    # Keep each x tile <= ~3 MiB so 2 pipeline buffers (+ y + output) stay well
    # under the smallest scoped-VMEM default (16 MiB on v5e; v7x has 64 MiB total).
    budget_bytes = 3 * 1024 * 1024
    max_rows = max(8, budget_bytes // max(1, c * itemsize))
    if n <= max_rows:
        return n                                  # full batch in one block (always legal)
    return max(8, min(1024, (max_rows // 8) * 8)) # multiple of 8 when tiling


def svm_loss(x, y, *, n_classes, alpha, loss_weight, row_tile=None):
    """loss_weight * mean_i [ max_j (x_ij + alpha*1[j!=y_i]) - x_{i,y_i} ]."""
    n, c = x.shape
    assert c == n_classes
    alpha = float(alpha) if alpha is not None else 1.0
    loss_weight = float(loss_weight)

    if row_tile is None:
        row_tile = _choose_row_tile(n, c, jnp.dtype(x.dtype).itemsize)
    if row_tile < n:
        assert row_tile % 8 == 0, "row tile must be a multiple of 8 when smaller than N"
    num_tiles = -(-n // row_tile)

    y2d = y.astype(jnp.int32).reshape(n, 1)

    kernel = functools.partial(_svm_loss_kernel, alpha=alpha, n_rows=n)

    partials = pl.pallas_call(
        kernel,
        out_shape=jax.ShapeDtypeStruct((num_tiles, 8, 128), jnp.float32),
        grid_spec=pltpu.PrefetchScalarGridSpec(
            num_scalar_prefetch=0,
            grid=(num_tiles,),
            in_specs=[
                pl.BlockSpec((row_tile, c), lambda i: (i, 0)),  # x, native dtype (no wrapper cast)
                pl.BlockSpec((row_tile, 1), lambda i: (i, 0)),  # y, int32
            ],
            out_specs=pl.BlockSpec((1, 8, 128), lambda i: (i, 0, 0)),
        ),
        compiler_params=pltpu.CompilerParams(
            dimension_semantics=("parallel",),  # batch tiles independent -> megacore shard on v7x
        ),
    )(x, y2d)

    # Tiny final reduction over per-tile partial sums; exact mean over true N.
    total = jnp.sum(partials[:, 0, 0])
    return total * (loss_weight / n)


def svm_loss_ref(x, y, *, n_classes, alpha, loss_weight):
    alpha = float(alpha) if alpha is not None else 1.0
    xf = x.astype(jnp.float32)
    labels = jnp.arange(n_classes, dtype=jnp.int32)
    delta = (labels[None, :] != y[:, None].astype(jnp.int32)).astype(jnp.float32) * alpha
    aug = xf + delta
    gt = jnp.take_along_axis(xf, y[:, None].astype(jnp.int32), axis=1)[:, 0]
    return jnp.mean(jnp.max(aug, axis=-1) - gt) * float(loss_weight)


if __name__ == "__main__":
    # Module "parameters" (from __init__ signature).
    n_classes = 128
    alpha = 1.0
    loss_weight = 2.0

    # Deterministic small inputs; batch=200 with row_tile=64 -> 4 grid steps
    # including a ragged final tile (exercises the row mask).
    batch = 200
    key = jax.random.PRNGKey(0)
    kx, ky = jax.random.split(key)
    x = jax.random.normal(kx, (batch, n_classes), dtype=jnp.float32)
    y = jax.random.randint(ky, (batch,), 0, n_classes, dtype=jnp.int32)

    out = svm_loss(x, y, n_classes=n_classes, alpha=alpha,
                   loss_weight=loss_weight, row_tile=64)
    out = jax.block_until_ready(out)
    ref = svm_loss_ref(x, y, n_classes=n_classes, alpha=alpha, loss_weight=loss_weight)
    assert jnp.allclose(out, ref, atol=1e-5, rtol=1e-5), (out, ref)

    # Native-bf16 path: no wrapper upcast, per-tile upcast inside the kernel.
    xb = x.astype(jnp.bfloat16)
    out_b = svm_loss(xb, y, n_classes=n_classes, alpha=alpha, loss_weight=loss_weight)
    out_b = jax.block_until_ready(out_b)
    ref_b = svm_loss_ref(xb, y, n_classes=n_classes, alpha=alpha, loss_weight=loss_weight)
    assert jnp.allclose(out_b, ref_b, atol=1e-2, rtol=1e-2), (out_b, ref_b)

    print("KERNEL_OK")
</pallas_src>

<mosaic_0001>
module attributes {stable_mosaic.version = 11 : i64} {
  func.func @_svm_loss_kernel(%arg0: i32, %arg1: memref<64x128xf32, #tpu.memory_space<vmem>>, %arg2: memref<64x1xi32, #tpu.memory_space<vmem>>, %arg3: memref<1x8x128xf32, #tpu.memory_space<vmem>>) attributes {dimension_semantics = [#tpu.dimension_semantics<parallel>], iteration_bounds = array<i64: 4>, scalar_prefetch = 0 : i64, scratch_operands = 0 : i64, tpu.core_type = #tpu.core_type<tc>, window_params = [{transform_indices = @transform_0, window_bounds = array<i64: 64, 128>}, {transform_indices = @transform_1, window_bounds = array<i64: 64, 1>}, {transform_indices = @transform_2, window_bounds = array<i64: 1, 8, 128>}]} {
    %c0 = arith.constant 0 : index
    %c0_0 = arith.constant 0 : index
    %0 = vector.load %arg1[%c0, %c0_0] : memref<64x128xf32, #tpu.memory_space<vmem>>, vector<64x128xf32>
    %c0_1 = arith.constant 0 : index
    %c0_2 = arith.constant 0 : index
    %1 = vector.load %arg2[%c0_1, %c0_2] : memref<64x1xi32, #tpu.memory_space<vmem>>, vector<64x1xi32>
    %2 = tpu.iota {dimensions = array<i32: 1>} : vector<64x128xi32>
    %3 = vector.broadcast %1 : vector<64x1xi32> to vector<64x128xi32>
    %4 = arith.cmpi eq, %2, %3 : vector<64x128xi32>
    %cst = arith.constant 0.000000e+00 : f32
    %cst_3 = arith.constant 1.000000e+00 : f32
    %5 = vector.broadcast %cst : f32 to vector<64x128xf32>
    %6 = vector.broadcast %cst_3 : f32 to vector<64x128xf32>
    %7 = arith.select %4, %5, %6 : vector<64x128xi1>, vector<64x128xf32>
    %8 = arith.addf %0, %7 : vector<64x128xf32>
    %cst_4 = arith.constant dense<0xFF800000> : vector<64xf32>
    %9 = vector.multi_reduction <maximumf>, %8, %cst_4 [1] : vector<64x128xf32> to vector<64xf32>
    %10 = vector.shape_cast %9 : vector<64xf32> to vector<64x1xf32>
    %cst_5 = arith.constant 0.000000e+00 : f32
    %11 = vector.broadcast %cst_5 : f32 to vector<64x128xf32>
    %12 = arith.select %4, %0, %11 : vector<64x128xi1>, vector<64x128xf32>
    %cst_6 = arith.constant dense<0.000000e+00> : vector<64xf32>
    %13 = vector.multi_reduction <add>, %12, %cst_6 [1] : vector<64x128xf32> to vector<64xf32>
    %14 = vector.shape_cast %13 : vector<64xf32> to vector<64x1xf32>
    %15 = arith.subf %10, %14 : vector<64x1xf32>
    %c64_i32 = arith.constant 64 : i32
    %16 = arith.muli %arg0, %c64_i32 : i32
    %17 = tpu.iota {dimensions = array<i32: 0>} : vector<64x1xi32>
    %18 = vector.broadcast %16 : i32 to vector<64x1xi32>
    %19 = arith.addi %18, %17 : vector<64x1xi32>
    %c200_i32 = arith.constant 200 : i32
    %20 = vector.broadcast %c200_i32 : i32 to vector<64x1xi32>
    %21 = arith.cmpi slt, %19, %20 : vector<64x1xi32>
    %cst_7 = arith.constant 0.000000e+00 : f32
    %22 = vector.broadcast %cst_7 : f32 to vector<64x1xf32>
    %23 = arith.select %21, %15, %22 : vector<64x1xi1>, vector<64x1xf32>
    %24 = vector.shape_cast %23 : vector<64x1xf32> to vector<1x64x1xf32>
    %cst_8 = arith.constant dense<0.000000e+00> : vector<1xf32>
    %25 = vector.multi_reduction <add>, %24, %cst_8 [1, 2] : vector<1x64x1xf32> to vector<1xf32>
    %26 = vector.shape_cast %25 : vector<1xf32> to vector<1x1x1xf32>
    %27 = vector.extract %26[0, 0, 0] : f32 from vector<1x1x1xf32>
    %28 = vector.broadcast %27 : f32 to vector<1x8x128xf32>
    %c0_9 = arith.constant 0 : index
    %c0_10 = arith.constant 0 : index
    %c0_11 = arith.constant 0 : index
    %29 = vector.load %arg3[%c0_9, %c0_10, %c0_11] : memref<1x8x128xf32, #tpu.memory_space<vmem>>, vector<1x8x128xf32>
    tpu.vector_store %arg3[%c0_9, %c0_10, %c0_11], %28 {strides = array<i32>} : memref<1x8x128xf32, #tpu.memory_space<vmem>>, vector<1x8x128xf32>,
    return
  }
  func.func @transform_0(%arg0: i32) -> (i32, i32) {
    %c0_i32 = arith.constant 0 : i32
    %c0_i32_0 = arith.constant 0 : i32
    return %arg0, %c0_i32 : i32, i32
  }
  func.func @transform_1(%arg0: i32) -> (i32, i32) {
    %c0_i32 = arith.constant 0 : i32
    %c0_i32_0 = arith.constant 0 : i32
    return %arg0, %c0_i32 : i32, i32
  }
  func.func @transform_2(%arg0: i32) -> (i32, i32, i32) {
    %c0_i32 = arith.constant 0 : i32
    %c0_i32_0 = arith.constant 0 : i32
    %c0_i32_1 = arith.constant 0 : i32
    return %arg0, %c0_i32, %c0_i32_0 : i32, i32, i32
  }
}

</mosaic_0001>

<llo_original>
// kernel: tpu_custom_call.1
$region0: #{tpu_custom_call.1}
  #allocation0 [shape = 'u32[]', space=smem, size = 0x4, offset = 0x4, fixed_abs, tag = 'smem constant byte address 0x4 - core index']
  #allocation1 [shape = 'u32[72,128]{1,0:T(1,128)}', space=vmem, size = 0x9000, scoped, tag = 'internal scratch']
  %s0 = inlined_call_operand.vmem [shape: f32[200,128], index: 0, kind: input, shape index: {}]
  %s1 = inlined_call_operand.vmem [shape: s32[200,1], index: 1, kind: input, shape index: {}]
  %s2 = inlined_call_operand.hbm [shape: f32[4,8,128], index: 2, kind: output, shape index: {}]
  %s3 = sld [smem:[#allocation0]]
  $region41: #{tpu_custom_call.1} parent=0
    _
  %s5 = ssub.s32 1, %s3
  %s6 = scalar_select 0, %s5, %s3
  $region1: #{tpu_custom_call.1} parent=0
    #allocation2 [shape = 'u8[8192]{0}', space=vmem, size = 0x2000, scoped, tag = 'output window, operand 0']
    #allocation3 [shape = 's32[2]{0}', space=sflag, size = 0x8, scoped, tag = 'scoped memory for tpu_custom_call.1']
    %7 = vsyncpa [#allocation3], 0
    %s8 = scalar_lea.sflag [#allocation3], 1
    %9 = vsyncpa %s8, 0
    loop: start=0, step=1, limit=6
    $region2: #{tpu_custom_call.1} parent=1 // loop_pre_header
      _
    $region3: #{tpu_custom_call.1} parent=1 // loop_header
      %s11 = sphi 0, %s15
      %p12 = scmp.ge.s32.totalorder %s11, 6
      %s21 = sphi 0, %s23
      %s24 = sphi 0, %s21
      %s25 = sphi 0, %s24
      %s41 = sphi 0, %s25
      %s47 = sphi 0, %s49
      %s50 = sphi 0, %s47
      %s51 = sphi 0, %s50
      %s67 = sphi 0, %s51
      %s73 = sphi 0, %s75
      %s76 = sphi 0, %s73
      %s77 = sphi 0, %s76
      %s93 = sphi 0, %s77
    $region4: #{tpu_custom_call.1} parent=1 // loop_header_branch
      %14 = sbr.rel (%p12) target = $region8
    $region5: #{tpu_custom_call.1} parent=1 // loop_body
      %s16 = ssub.s32 %s11, 1
      %s17 = ssub.s32 %s11, 2
      %s18 = sadd.s32 %s11, 1
      %s19 = ssub.s32 %s11, %s18
      %p20 = scmp.eq.s32.totalorder %s19, 0
      %s22 = sadd.s32 %s21, 1
      %s23 = scalar_select %p20, %s21, %s22
      %p26 = pneg %p20
      %p27 = scmp.eq.s32.totalorder %s11, 3
      %p28 = por %p26, %p27
      %p29 = scmp.ne.s32.totalorder %s21, %s24
      %p30 = scmp.eq.s32.totalorder %s11, 0
      %p31 = por %p29, %p30
      %p32 = scmp.ne.s32.totalorder %s21, %s24
      %p33 = scmp.eq.s32.totalorder %s16, 3
      %p34 = por %p32, %p33
      %p35 = scmp.ne.s32.totalorder %s24, %s25
      %p36 = scmp.eq.s32.totalorder %s16, 0
      %p37 = por %p35, %p36
      %p38 = scmp.ne.s32.totalorder %s24, %s25
      %p39 = scmp.eq.s32.totalorder %s17, 3
      %p40 = por %p38, %p39
      %p42 = scmp.ne.s32.totalorder %s25, %s41
      %p43 = scmp.eq.s32.totalorder %s17, 0
      %p44 = por %p42, %p43
      %s45 = ssub.s32 %s11, %s18
      %p46 = scmp.eq.s32.totalorder %s45, 0
      %s48 = sadd.s32 %s47, 1
      %s49 = scalar_select %p46, %s47, %s48
      %p52 = pneg %p46
      %p53 = scmp.eq.s32.totalorder %s11, 3
      %p54 = por %p52, %p53
      %p55 = scmp.ne.s32.totalorder %s47, %s50
      %p56 = scmp.eq.s32.totalorder %s11, 0
      %p57 = por %p55, %p56
      %p58 = scmp.ne.s32.totalorder %s47, %s50
      %p59 = scmp.eq.s32.totalorder %s16, 3
      %p60 = por %p58, %p59
      %p61 = scmp.ne.s32.totalorder %s50, %s51
      %p62 = scmp.eq.s32.totalorder %s16, 0
      %p63 = por %p61, %p62
      %p64 = scmp.ne.s32.totalorder %s50, %s51
      %p65 = scmp.eq.s32.totalorder %s17, 3
      %p66 = por %p64, %p65
      %p68 = scmp.ne.s32.totalorder %s51, %s67
      %p69 = scmp.eq.s32.totalorder %s17, 0
      %p70 = por %p68, %p69
      %s71 = ssub.s32 %s11, %s18
      %p72 = scmp.eq.s32.totalorder %s71, 0
      %s74 = sadd.s32 %s73, 1
      %s75 = scalar_select %p72, %s73, %s74
      %p78 = pneg %p72
      %p79 = scmp.eq.s32.totalorder %s11, 3
      %p80 = por %p78, %p79
      %p81 = scmp.ne.s32.totalorder %s73, %s76
      %p82 = scmp.eq.s32.totalorder %s11, 0
      %p83 = por %p81, %p82
      %p84 = scmp.ne.s32.totalorder %s73, %s76
      %p85 = scmp.eq.s32.totalorder %s16, 3
      %p86 = por %p84, %p85
      %p87 = scmp.ne.s32.totalorder %s76, %s77
      %p88 = scmp.eq.s32.totalorder %s16, 0
      %p89 = por %p87, %p88
      %p90 = scmp.ne.s32.totalorder %s76, %s77
      %p91 = scmp.eq.s32.totalorder %s17, 3
      %p92 = por %p90, %p91
      %p94 = scmp.ne.s32.totalorder %s77, %s93
      %p95 = scmp.eq.s32.totalorder %s17, 0
      %p96 = por %p94, %p95
      %p97 = scmp.le.s32.totalorder 1, %s11
      %p98 = scmp.lt.s32.totalorder %s11, 5
      %p99 = pnand %p97, %p98
      %p100 = pneg %p99
      // Predicated region
      $region9: #{tpu_custom_call.1} parent=5 // pred_check
        _
      $region10: #{tpu_custom_call.1} parent=5 // pred_check_branch
        %102 = sbr.rel (%p99) target = $region12
      $region11: #{tpu_custom_call.1} parent=5 // pred_region
        %s103 = ssub.s32 %s11, 1
      $region12: #{tpu_custom_call.1} parent=5 // pred_fallthru
        _
      %p104 = scmp.lt.s32.totalorder %s11, 4
      // Predicated region
      $region13: #{tpu_custom_call.1} parent=5 // pred_check
        %p105 = pneg %p104
      $region14: #{tpu_custom_call.1} parent=5 // pred_check_branch
        %107 = sbr.rel (%p105) target = $region16
      $region15: #{tpu_custom_call.1} parent=5 // pred_region
        // Predicated region
        $region17: #{tpu_custom_call.1} parent=15 // pred_check
          %p108 = pneg %p31
        $region18: #{tpu_custom_call.1} parent=15 // pred_check_branch
          %110 = sbr.rel (%p108) target = $region20
        $region19: #{tpu_custom_call.1} parent=15 // pred_region
          %s111 = smul.u32 8, %s11
          %s112 = ssub.s32 25, %s111
          %p113 = scmp.lt.s32.totalorder %s112, 8
          %s114 = scalar_select %p113, %s112, 8
          %s115 = smul.u32 8, %s114
          %p116 = scmp.lt.s32.totalorder %s111, 24
          %s117 = scalar_select %p116, %s111, 24
          %s118 = smul.addr %s117, 8
          %s119 = scalar_lea.vmem %s0, %s118
          %s120 = smul.u32 8, %s11
          %s121 = ssub.s32 25, %s120
          %p122 = scmp.lt.s32.totalorder %s121, 8
          %s123 = scalar_select %p122, %s121, 8
          %s124 = smul.u32 8, %s123
        $region20: #{tpu_custom_call.1} parent=15 // pred_fallthru
          _
        // Predicated region
        $region21: #{tpu_custom_call.1} parent=15 // pred_check
          %p125 = pneg %p57
        $region22: #{tpu_custom_call.1} parent=15 // pred_check_branch
          %127 = sbr.rel (%p125) target = $region24
        $region23: #{tpu_custom_call.1} parent=15 // pred_region
          %s128 = smul.u32 8, %s11
          %s129 = ssub.s32 25, %s128
          %p130 = scmp.lt.s32.totalorder %s129, 8
          %s131 = scalar_select %p130, %s129, 8
          %s132 = smul.u32 8, %s131
          %p133 = scmp.lt.s32.totalorder %s128, 24
          %s134 = scalar_select %p133, %s128, 24
          %s135 = smul.addr %s134, 8
          %s136 = scalar_lea.vmem %s1, %s135
          %s137 = smul.u32 8, %s11
          %s138 = ssub.s32 25, %s137
          %p139 = scmp.lt.s32.totalorder %s138, 8
          %s140 = scalar_select %p139, %s138, 8
          %s141 = smul.u32 8, %s140
        $region24: #{tpu_custom_call.1} parent=15 // pred_fallthru
          _
      $region16: #{tpu_custom_call.1} parent=5 // pred_fallthru
        _
      %p142 = scmp.le.s32.totalorder 1, %s11
      %p143 = scmp.lt.s32.totalorder %s11, 5
      %p144 = pnand %p142, %p143
      %p145 = pneg %p144
      // Predicated region
      $region25: #{tpu_custom_call.1} parent=5 // pred_check
        _
      $region26: #{tpu_custom_call.1} parent=5 // pred_check_branch
        %147 = sbr.rel (%p144) target = $region28
      $region27: #{tpu_custom_call.1} parent=5 // pred_region
        %s148 = ssub.s32 %s11, 1
        %s149 = smul.u32 8, %s16
        %s150 = ssub.s32 25, %s149
        %p151 = scmp.lt.s32.totalorder %s150, 8
        %s152 = scalar_select %p151, %s150, 8
        %s153 = smul.u32 8, %s152
        %p154 = scmp.lt.s32.totalorder %s149, 24
        %s155 = scalar_select %p154, %s149, 24
        %s156 = smul.addr %s155, 8
        %s157 = scalar_lea.vmem %s0, %s156
        %p158 = pneg %p37
        %p159 = pneg %p34
        %s160 = smul.u32 8, %s16
        %s161 = ssub.s32 25, %s160
        %p162 = scmp.lt.s32.totalorder %s161, 8
        %s163 = scalar_select %p162, %s161, 8
        %s164 = smul.u32 8, %s163
        %p165 = scmp.lt.s32.totalorder %s160, 24
        %s166 = scalar_select %p165, %s160, 24
        %s167 = smul.addr %s166, 8
        %s168 = scalar_lea.vmem %s1, %s167
        %p169 = pneg %p63
        %p170 = pneg %p60
        %p171 = pneg %p89
        %p172 = pneg %p86
        %s173 = sand.u32 %s76, 1
        %s174 = scalar_lea.sflag [#allocation3], %s173
        %s175 = sand.u32 %s76, 1
        %s176 = smul.addr %s175, 8
        %s177 = scalar_lea.vmem [#allocation2], %s176
        %s178 = smul.u32 8, %s16
        %s179 = ssub.s32 25, %s178
        %p180 = scmp.lt.s32.totalorder %s179, 8
        %s181 = scalar_select %p180, %s179, 8
        %s182 = smul.u32 8, %s181
        %p183 = scmp.lt.s32.totalorder %s178, 24
        %s184 = scalar_select %p183, %s178, 24
        %s185 = smul.addr %s184, 8
        %s186 = scalar_lea.vmem %s0, %s185
        %s187 = smul.u32 8, %s16
        %s188 = ssub.s32 25, %s187
        %p189 = scmp.lt.s32.totalorder %s188, 8
        %s190 = scalar_select %p189, %s188, 8
        %s191 = smul.u32 8, %s190
        %s192 = smul.u32 8, %s16
        %s193 = ssub.s32 25, %s192
        %p194 = scmp.lt.s32.totalorder %s193, 8
        %s195 = scalar_select %p194, %s193, 8
        %s196 = smul.u32 8, %s195
        %p197 = scmp.lt.s32.totalorder %s192, 24
        %s198 = scalar_select %p197, %s192, 24
        %s199 = smul.addr %s198, 8
        %s200 = scalar_lea.vmem %s1, %s199
        %s201 = smul.u32 8, %s16
        %s202 = ssub.s32 25, %s201
        %p203 = scmp.lt.s32.totalorder %s202, 8
        %s204 = scalar_select %p203, %s202, 8
        %s205 = smul.u32 8, %s204
        %v206 = vld [vmem:[%s186] sm:$0xff]
        %v207 = vld [vmem:[%s186 + $0x8] sm:$0xff]
        %v208 = vld [vmem:[%s186 + $0x10] sm:$0xff]
        %v209 = vld [vmem:[%s186 + $0x18] sm:$0xff]
        %v210 = vld [vmem:[%s186 + $0x20] sm:$0xff]
        %v211 = vld [vmem:[%s186 + $0x28] sm:$0xff]
        %v212 = vld [vmem:[%s186 + $0x30] sm:$0xff]
        %v213 = vld [vmem:[%s186 + $0x38] sm:$0xff]
        %v214 = vld [vmem:[%s200] sm:$0xff]
        %v215 = vld [vmem:[%s200 + $0x8] sm:$0xff]
        %v216 = vld [vmem:[%s200 + $0x10] sm:$0xff]
        %v217 = vld [vmem:[%s200 + $0x18] sm:$0xff]
        %v218 = vld [vmem:[%s200 + $0x20] sm:$0xff]
        %v219 = vld [vmem:[%s200 + $0x28] sm:$0xff]
        %v220 = vld [vmem:[%s200 + $0x30] sm:$0xff]
        %v221 = vld [vmem:[%s200 + $0x38] sm:$0xff]
        %v222 = vlaneseq
        %v223 = vand.u32 %v222, 127
        %224 = vset.pattern.permute.xlu0 0
        %225 = vperm.xlu0 %224, %v214
        %v226 = vpop.permute.xlu0 %225
        %227 = vset.pattern.permute.xlu0 0
        %228 = vperm.xlu0 %227, %v215
        %v229 = vpop.permute.xlu0 %228
        %230 = vset.pattern.permute.xlu0 0
        %231 = vperm.xlu0 %230, %v216
        %v232 = vpop.permute.xlu0 %231
        %233 = vset.pattern.permute.xlu0 0
        %234 = vperm.xlu0 %233, %v217
        %v235 = vpop.permute.xlu0 %234
        %236 = vset.pattern.permute.xlu0 0
        %237 = vperm.xlu0 %236, %v218
        %v238 = vpop.permute.xlu0 %237
        %239 = vset.pattern.permute.xlu0 0
        %240 = vperm.xlu0 %239, %v219
        %v241 = vpop.permute.xlu0 %240
        %242 = vset.pattern.permute.xlu0 0
        %243 = vperm.xlu0 %242, %v220
        %v244 = vpop.permute.xlu0 %243
        %245 = vset.pattern.permute.xlu0 0
        %246 = vperm.xlu0 %245, %v221
        %v247 = vpop.permute.xlu0 %246
        %vm248 = vcmp.eq.s32.totalorder %v223, %v226
        %vm249 = vcmp.eq.s32.totalorder %v223, %v229
        %vm250 = vcmp.eq.s32.totalorder %v223, %v232
        %vm251 = vcmp.eq.s32.totalorder %v223, %v235
        %vm252 = vcmp.eq.s32.totalorder %v223, %v238
        %vm253 = vcmp.eq.s32.totalorder %v223, %v241
        %vm254 = vcmp.eq.s32.totalorder %v223, %v244
        %vm255 = vcmp.eq.s32.totalorder %v223, %v247
        %v256 = vsel %vm248, 0.0, 1.0
        %v257 = vsel %vm249, 0.0, 1.0
        %v258 = vsel %vm250, 0.0, 1.0
        %v259 = vsel %vm251, 0.0, 1.0
        %v260 = vsel %vm252, 0.0, 1.0
        %v261 = vsel %vm253, 0.0, 1.0
        %v262 = vsel %vm254, 0.0, 1.0
        %v263 = vsel %vm255, 0.0, 1.0
        %v264 = vadd.f32 %v206, %v256
        %v265 = vadd.f32 %v207, %v257
        %v266 = vadd.f32 %v208, %v258
        %v267 = vadd.f32 %v209, %v259
        %v268 = vadd.f32 %v210, %v260
        %v269 = vadd.f32 %v211, %v261
        %v270 = vadd.f32 %v212, %v262
        %v271 = vadd.f32 %v213, %v263
        %272 = vmax.xlane.f32.xlu0 %v264
        %v273 = vpop.xlane.xlu0 %272
        %274 = vmax.xlane.f32.xlu0 %v265
        %v275 = vpop.xlane.xlu0 %274
        %276 = vmax.xlane.f32.xlu0 %v266
        %v277 = vpop.xlane.xlu0 %276
        %278 = vmax.xlane.f32.xlu0 %v267
        %v279 = vpop.xlane.xlu0 %278
        %280 = vmax.xlane.f32.xlu0 %v268
        %v281 = vpop.xlane.xlu0 %280
        %282 = vmax.xlane.f32.xlu0 %v269
        %v283 = vpop.xlane.xlu0 %282
        %284 = vmax.xlane.f32.xlu0 %v270
        %v285 = vpop.xlane.xlu0 %284
        %286 = vmax.xlane.f32.xlu0 %v271
        %v287 = vpop.xlane.xlu0 %286
        %v288 = vsel %vm248, %v206, 0.0
        %v289 = vsel %vm249, %v207, 0.0
        %v290 = vsel %vm250, %v208, 0.0
        %v291 = vsel %vm251, %v209, 0.0
        %v292 = vsel %vm252, %v210, 0.0
        %v293 = vsel %vm253, %v211, 0.0
        %v294 = vsel %vm254, %v212, 0.0
        %v295 = vsel %vm255, %v213, 0.0
        %296 = vadd.xlane.f32.xlu0 %v288
        %v297 = vpop.xlane.xlu0 %296
        %298 = vadd.xlane.f32.xlu0 %v289
        %v299 = vpop.xlane.xlu0 %298
        %300 = vadd.xlane.f32.xlu0 %v290
        %v301 = vpop.xlane.xlu0 %300
        %302 = vadd.xlane.f32.xlu0 %v291
        %v303 = vpop.xlane.xlu0 %302
        %304 = vadd.xlane.f32.xlu0 %v292
        %v305 = vpop.xlane.xlu0 %304
        %306 = vadd.xlane.f32.xlu0 %v293
        %v307 = vpop.xlane.xlu0 %306
        %308 = vadd.xlane.f32.xlu0 %v294
        %v309 = vpop.xlane.xlu0 %308
        %310 = vadd.xlane.f32.xlu0 %v295
        %v311 = vpop.xlane.xlu0 %310
        %v312 = vsub.f32 %v273, %v297
        %v313 = vsub.f32 %v275, %v299
        %v314 = vsub.f32 %v277, %v301
        %v315 = vsub.f32 %v279, %v303
        %v316 = vsub.f32 %v281, %v305
        %v317 = vsub.f32 %v283, %v307
        %v318 = vsub.f32 %v285, %v309
        %v319 = vsub.f32 %v287, %v311
        %s320 = smul.u32 %s16, 64
        %v321 = vlaneseq
        %v322 = vshrl.u32 %v321, 7
        %v323 = vadd.s32 %v322, 8
        %v324 = vadd.s32 %v322, 16
        %v325 = vadd.s32 %v322, 24
        %v326 = vadd.s32 %v322, 32
        %v327 = vadd.s32 %v322, 40
        %v328 = vadd.s32 %v322, 48
        %v329 = vadd.s32 %v322, 56
        %v330 = vstv %s320
        %v331 = vadd.s32 %v330, %v322
        %v332 = vadd.s32 %v330, %v323
        %v333 = vadd.s32 %v330, %v324
        %v334 = vadd.s32 %v330, %v325
        %v335 = vadd.s32 %v330, %v326
        %v336 = vadd.s32 %v330, %v327
        %v337 = vadd.s32 %v330, %v328
        %v338 = vadd.s32 %v330, %v329
        %vm339 = vcmp.lt.s32.totalorder %v331, 200
        %vm340 = vcmp.lt.s32.totalorder %v332, 200
        %vm341 = vcmp.lt.s32.totalorder %v333, 200
        %vm342 = vcmp.lt.s32.totalorder %v334, 200
        %vm343 = vcmp.lt.s32.totalorder %v335, 200
        %vm344 = vcmp.lt.s32.totalorder %v336, 200
        %vm345 = vcmp.lt.s32.totalorder %v337, 200
        %vm346 = vcmp.lt.s32.totalorder %v338, 200
        %v347 = vsel %vm339, %v312, 0.0
        %v348 = vsel %vm340, %v313, 0.0
        %v349 = vsel %vm341, %v314, 0.0
        %v350 = vsel %vm342, %v315, 0.0
        %v351 = vsel %vm343, %v316, 0.0
        %v352 = vsel %vm344, %v317, 0.0
        %v353 = vsel %vm345, %v318, 0.0
        %v354 = vsel %vm346, %v319, 0.0
        %vm355 = vcmask 7168
        %v356 = vsel %vm355, %v347, 0.0
        %v357 = vsel %vm355, %v348, 0.0
        %v358 = vadd.f32 %v356, %v357
        %v359 = vsel %vm355, %v349, 0.0
        %v360 = vadd.f32 %v358, %v359
        %v361 = vsel %vm355, %v350, 0.0
        %v362 = vadd.f32 %v360, %v361
        %v363 = vsel %vm355, %v351, 0.0
        %v364 = vadd.f32 %v362, %v363
        %v365 = vsel %vm355, %v352, 0.0
        %v366 = vadd.f32 %v364, %v365
        %v367 = vsel %vm355, %v353, 0.0
        %v368 = vadd.f32 %v366, %v367
        %v369 = vsel %vm355, %v354, 0.0
        %v370 = vadd.f32 %v368, %v369
        %371 = vadd.xlane.f32.xlu0 %v370
        %v372 = vpop.xlane.xlu0 %371
        %v373 = vrot.slane %v372, 4
        %v374 = vadd.f32 %v372, %v373
        %v375 = vrot.slane %v374, 2
        %v376 = vadd.f32 %v374, %v375
        %v377 = vrot.slane %v376, 1
        %v378 = vadd.f32 %v376, %v377
        %s379 = vtos %v378
        %v380 = vstv %s379
        %381 = vst [vmem:[%s177] sm:$0xff] %v380
        %s382 = sand.u32 %s76, 1
        %s383 = scalar_lea.sflag [#allocation3], %s382
        %s384 = sand.u32 %s76, 1
        %s385 = smul.addr %s384, 8
        %s386 = scalar_lea.vmem [#allocation2], %s385
        // Predicated region
        $region29: #{tpu_custom_call.1} parent=27 // pred_check
          %p387 = pneg %p86
        $region30: #{tpu_custom_call.1} parent=27 // pred_check_branch
          %389 = sbr.rel (%p387) target = $region32
        $region31: #{tpu_custom_call.1} parent=27 // pred_region
          %391 = vsyncadd %s383, 0
          %s392 = smul.addr %s16, 8
          %s393 = scalar_lea.hbm %s2, %s392
          %s395 = sshll.u32 %s386, 4
          %s396 = int_to_ptr.vmem [resolvable:$true] %s395
          %s397 = sshll.u32 %s393, 4
          %s398 = int_to_ptr.hbm [resolvable:$true] %s397
          %400 = dma.vmem_to_hbm [thread:$0]  %s396, 128, %s398, %s383
        $region32: #{tpu_custom_call.1} parent=27 // pred_fallthru
          _
      $region28: #{tpu_custom_call.1} parent=5 // pred_fallthru
        _
      %p401 = scmp.le.s32.totalorder 2, %s11
      // Predicated region
      $region33: #{tpu_custom_call.1} parent=5 // pred_check
        %p402 = pneg %p401
      $region34: #{tpu_custom_call.1} parent=5 // pred_check_branch
        %404 = sbr.rel (%p402) target = $region36
      $region35: #{tpu_custom_call.1} parent=5 // pred_region
        %s405 = ssub.s32 %s11, 2
        // Predicated region
        $region37: #{tpu_custom_call.1} parent=35 // pred_check
          %p406 = pneg %p92
        $region38: #{tpu_custom_call.1} parent=35 // pred_check_branch
          %408 = sbr.rel (%p406) target = $region40
        $region39: #{tpu_custom_call.1} parent=35 // pred_region
          %s409 = sand.u32 %s77, 1
          %s410 = scalar_lea.sflag [#allocation3], %s409
          %s411 = sand.u32 %s77, 1
          %s412 = smul.addr %s411, 8
          %s413 = scalar_lea.vmem [#allocation2], %s412
          %415 = dma.done %s410, 128
        $region40: #{tpu_custom_call.1} parent=35 // pred_fallthru
          _
      $region36: #{tpu_custom_call.1} parent=5 // pred_fallthru
        _
    $region6: #{tpu_custom_call.1} parent=1 // loop_footer
      %s15 = sadd.s32 1, %s11
    $region7: #{tpu_custom_call.1} parent=1 // loop_footer_branch
      %10 = sbr.rel target = $region3
    $region8: #{tpu_custom_call.1} parent=1 // loop_exit
      _
    %416 = vsyncpa [#allocation3], 1
    %s417 = scalar_lea.sflag [#allocation3], 1
    %418 = vsyncpa %s417, 1

</llo_original>
